<compile_context>
chip_gen: v7x
topology: tpu7x:2x2x1
jax: 0.10.0
libtpu: 0.0.40
codegen_flags: <defaults>
</compile_context>

<pallas_src>
import functools
import math

import jax
import jax.numpy as jnp
from jax.experimental import pallas as pl
from jax.experimental.pallas import tpu as pltpu


NUM_EMBEDDINGS = 256                       # module __init__ arg
EMBED_DIM = NUM_EMBEDDINGS // 2            # = 128, lane-aligned


def _round_up(x, m):
    return ((x + m - 1) // m) * m


def _embedding_kernel(idx_ref, emb_ref, out_ref):
    """Gather rows of the embedding table via one-hot @ table on the MXU.

    idx_ref: (TN, 1) int32 VMEM tile of (already flattened) indices
    emb_ref: (V, D)  float32 full embedding table in VMEM (grid-invariant)
    out_ref: (TN, D) float32 output tile
    """
    v = emb_ref.shape[0]
    idx = idx_ref[...]                                     # (TN, 1) int32

    # Verbatim translation of the module's forward remap:
    #   x = torch.where(x < num_embeddings, x, num_embeddings - 1)
    #   x = torch.where(x < 0, x, 0)
    # NOTE: the second `where` maps every NON-negative index to row 0 -- that
    # is exactly what the PyTorch source does, so it is reproduced as-is.
    idx = jnp.where(idx < v, idx, v - 1)
    idx = jnp.where(idx < 0, idx, 0)

    # One-hot gather on the MXU.  A (still-)negative index never matches the
    # iota and yields an all-zero row (nn.Embedding would raise there, which
    # is the only behavioral divergence and only for invalid input).
    iota = jax.lax.broadcasted_iota(jnp.int32, (idx.shape[0], v), 1)
    onehot = (iota == idx).astype(emb_ref.dtype)           # (TN, V)

    # Keeping f32 for exact parity with the f32 table/reference; a bf16
    # one-hot + bf16 table would halve MXU passes (v5e) and table DMA if the
    # consumer tolerates bf16 rounding.
    out_ref[...] = jnp.dot(onehot, emb_ref[...],
                           preferred_element_type=jnp.float32)

    # TODO(synk): training-mode dropout (p=0.1) could be added with
    # pltpu.prng_seed + pltpu.stateful_bernoulli; here we match eval-mode
    # (identity), the standard inference semantics of nn.Dropout.


@functools.partial(jax.jit, static_argnames=("tile_n",))
def category_embedding(x, emb_table, *, tile_n=1024):
    """x: integer array of arbitrary shape; emb_table: (V, D) float32.

    tile_n: N-tile size.  Large tiles (512-2048) keep this write-bound kernel
    near the HBM roofline and fill the MXU rows; the ragged last block (when
    tile_n does not divide N) is handled by Pallas' out-of-bounds masking, so
    no host-side pad of the indices and no post-hoc out[:n] copy of the
    (N, 128) f32 output is needed.
    """
    orig_shape = x.shape
    flat = x.reshape(-1).astype(jnp.int32)
    n = flat.shape[0]
    v, d = emb_table.shape

    # Never allocate a tile larger than the (sublane-rounded) problem size.
    tile = min(_round_up(tile_n, 8), _round_up(n, 8))
    grid = pl.cdiv(n, tile)

    flat2d = flat.reshape(n, 1)

    out = pl.pallas_call(
        _embedding_kernel,
        out_shape=jax.ShapeDtypeStruct((n, d), jnp.float32),
        grid_spec=pltpu.PrefetchScalarGridSpec(
            num_scalar_prefetch=0,
            grid=(grid,),
            in_specs=[
                # (tile, 1) int32 index tile, marches down the N axis.
                pl.BlockSpec((tile, 1), lambda i: (i, 0)),
                # Full 128 KiB table with a grid-invariant index map (0, 0):
                # Mosaic keeps it resident and does not re-DMA it per step.
                pl.BlockSpec((v, d), lambda i: (0, 0)),
            ],
            out_specs=pl.BlockSpec((tile, d), lambda i: (i, 0)),
        ),
        compiler_params=pltpu.CompilerParams(
            # Parallel N axis: no-op on v5e/v6e (1 TC), shards the grid across
            # both TensorCores on v7x whenever grid >= 2.
            dimension_semantics=("parallel",),
            # Per-step VMEM @ tile=1024: idx ~1 MiB (2 bufs) + out ~1 MiB
            # (2 bufs) + table 256 KiB (2 bufs) + one-hot/iota temps ~2 MiB
            # => ~4.5 MiB.  32 MiB fits the scoped defaults on v6e/v7x and is
            # well under every generation's physical VMEM (incl. v7x 64 MiB).
            vmem_limit_bytes=32 * 1024 * 1024,
        ),
    )(flat2d, emb_table)

    return out.reshape(*orig_shape, d)


def _reference(x, emb_table):
    """Pure-JAX reproduction of the module's forward (eval mode)."""
    v = emb_table.shape[0]
    idx = x.astype(jnp.int32)
    idx = jnp.where(idx < v, idx, v - 1)
    idx = jnp.where(idx < 0, idx, 0)
    return jnp.take(emb_table, idx, axis=0)


if __name__ == "__main__":
    key = jax.random.PRNGKey(0)
    k_w, k_x = jax.random.split(key)

    # Deterministic kaiming_normal_(mode='fan_out', nonlinearity='relu') on a
    # (V, D) weight: fan_out = V, std = sqrt(2 / fan_out).
    std = math.sqrt(2.0 / NUM_EMBEDDINGS)
    emb_table = (jax.random.normal(k_w, (NUM_EMBEDDINGS, EMBED_DIM),
                                   dtype=jnp.float32) * std)

    # Small index input (batch=2, seq=8), nonnegative, some values >= V to
    # exercise the high-clamp branch of the forward.
    x = jax.random.randint(k_x, (2, 8), 0, NUM_EMBEDDINGS + 10, dtype=jnp.int32)

    out = category_embedding(x, emb_table)
    out = jax.block_until_ready(out)

    ref = _reference(x, emb_table)
    assert out.shape == (2, 8, EMBED_DIM), out.shape
    assert jnp.allclose(out, ref, atol=1e-6), "mismatch vs reference"

    print("KERNEL_OK")
</pallas_src>

<mosaic_0001>
module attributes {stable_mosaic.version = 11 : i64} {
  func.func @_embedding_kernel(%arg0: i32, %arg1: memref<16x1xi32, #tpu.memory_space<vmem>>, %arg2: memref<256x128xf32, #tpu.memory_space<vmem>>, %arg3: memref<16x128xf32, #tpu.memory_space<vmem>>) attributes {dimension_semantics = [#tpu.dimension_semantics<parallel>], iteration_bounds = array<i64: 1>, scalar_prefetch = 0 : i64, scratch_operands = 0 : i64, tpu.core_type = #tpu.core_type<tc>, window_params = [{transform_indices = @transform_0, window_bounds = array<i64: 16, 1>}, {pipeline_mode = #tpu.pipeline_mode<synchronous>, transform_indices = @transform_1, window_bounds = array<i64: 256, 128>}, {transform_indices = @transform_2, window_bounds = array<i64: 16, 128>}]} {
    %c0 = arith.constant 0 : index
    %c0_0 = arith.constant 0 : index
    %0 = vector.load %arg1[%c0, %c0_0] : memref<16x1xi32, #tpu.memory_space<vmem>>, vector<16x1xi32>
    %c256_i32 = arith.constant 256 : i32
    %1 = vector.broadcast %c256_i32 : i32 to vector<16x1xi32>
    %2 = arith.cmpi slt, %0, %1 : vector<16x1xi32>
    %c255_i32 = arith.constant 255 : i32
    %3 = vector.broadcast %c255_i32 : i32 to vector<16x1xi32>
    %4 = arith.select %2, %0, %3 : vector<16x1xi1>, vector<16x1xi32>
    %c0_i32 = arith.constant 0 : i32
    %5 = vector.broadcast %c0_i32 : i32 to vector<16x1xi32>
    %6 = arith.cmpi slt, %4, %5 : vector<16x1xi32>
    %c0_i32_1 = arith.constant 0 : i32
    %7 = vector.broadcast %c0_i32_1 : i32 to vector<16x1xi32>
    %8 = arith.select %6, %4, %7 : vector<16x1xi1>, vector<16x1xi32>
    %9 = tpu.iota {dimensions = array<i32: 1>} : vector<16x256xi32>
    %10 = vector.broadcast %8 : vector<16x1xi32> to vector<16x256xi32>
    %11 = arith.cmpi eq, %9, %10 : vector<16x256xi32>
    %12 = arith.extui %11 : vector<16x256xi1> to vector<16x256xi32>
    %13 = arith.sitofp %12 : vector<16x256xi32> to vector<16x256xf32>
    %c0_2 = arith.constant 0 : index
    %c0_3 = arith.constant 0 : index
    %14 = vector.load %arg2[%c0_2, %c0_3] : memref<256x128xf32, #tpu.memory_space<vmem>>, vector<256x128xf32>
    %cst = arith.constant dense<0.000000e+00> : vector<16x128xf32>
    %15 = tpu.matmul %13, %14, %cst {dimension_numbers = #tpu.dot_dimension_numbers<[1], [0], [0], [1], [0, 0, 1, 1], [], []>} : vector<16x256xf32>, vector<256x128xf32>, vector<16x128xf32> -> vector<16x128xf32>
    %c0_4 = arith.constant 0 : index
    %c0_5 = arith.constant 0 : index
    %16 = vector.load %arg3[%c0_4, %c0_5] : memref<16x128xf32, #tpu.memory_space<vmem>>, vector<16x128xf32>
    tpu.vector_store %arg3[%c0_4, %c0_5], %15 {strides = array<i32>} : memref<16x128xf32, #tpu.memory_space<vmem>>, vector<16x128xf32>,
    return
  }
  func.func @transform_0(%arg0: i32) -> (i32, i32) {
    %c0_i32 = arith.constant 0 : i32
    %c0_i32_0 = arith.constant 0 : i32
    return %arg0, %c0_i32 : i32, i32
  }
  func.func @transform_1(%arg0: i32) -> (i32, i32) {
    %c0_i32 = arith.constant 0 : i32
    %c0_i32_0 = arith.constant 0 : i32
    %c0_i32_1 = arith.constant 0 : i32
    return %c0_i32, %c0_i32_0 : i32, i32
  }
  func.func @transform_2(%arg0: i32) -> (i32, i32) {
    %c0_i32 = arith.constant 0 : i32
    %c0_i32_0 = arith.constant 0 : i32
    return %arg0, %c0_i32 : i32, i32
  }
}

</mosaic_0001>

<llo_original>
// kernel: category_embedding.1
$region0: #{category_embedding.1}
  #allocation0 [shape = 'u32[]', space=smem, size = 0x4, offset = 0x4, fixed_abs, tag = 'smem constant byte address 0x4 - core index']
  #allocation1 [shape = 'u32[144,128]{1,0:T(1,128)}', space=vmem, size = 0x12000, scoped, tag = 'internal scratch']
  %s0 = inlined_call_operand.vmem [shape: s32[16,1], index: 0, kind: input, shape index: {}]
  %s1 = inlined_call_operand.hbm [shape: f32[256,128], index: 1, kind: input, shape index: {}]
  %s2 = inlined_call_operand.hbm [shape: f32[16,128], index: 2, kind: output, shape index: {}]
  %s3 = sld [smem:[#allocation0]]
  $region22: #{category_embedding.1} parent=0
    _
  %s5 = ssub.s32 1, %s3
  %s6 = scalar_select 0, %s5, %s3
  $region1: #{category_embedding.1} parent=0
    #allocation2 [shape = 'u8[131072]{0}', space=vmem, size = 0x20000, scoped, tag = 'input window, operand 1, single buffered']
    #allocation3 [shape = 's32[1]{0}', space=sflag, size = 0x4, scoped, tag = 'scoped memory for category_embedding.1']
    #allocation4 [shape = 's32[1]{0}', space=sflag, size = 0x4, scoped, tag = 'scoped memory for category_embedding.1']
    #allocation5 [shape = 'u8[8192]{0}', space=vmem, size = 0x2000, scoped, tag = 'output window, operand 0, single buffered']
    %7 = vsyncpa [#allocation3], 0
    %8 = vsyncpa [#allocation4], 0
    // Predicated region
    $region2: #{category_embedding.1} parent=1 // pred_check
      _
    $region3: #{category_embedding.1} parent=1 // pred_check_branch
      %10 = sbr.rel (0) target = $region5
    $region4: #{category_embedding.1} parent=1 // pred_region
      _
    $region5: #{category_embedding.1} parent=1 // pred_fallthru
      _
    // Predicated region
    $region6: #{category_embedding.1} parent=1 // pred_check
      _
    $region7: #{category_embedding.1} parent=1 // pred_check_branch
      %12 = sbr.rel (0) target = $region9
    $region8: #{category_embedding.1} parent=1 // pred_region
      %s14 = ssub.s32 4096, 4096
      %15 = vsyncadd [#allocation3], %s14
      %s16 = sshll.u32 [#allocation2], 4
      %s17 = int_to_ptr.vmem [resolvable:$true] %s16
      %22 = dma.hbm_to_vmem [thread:$0]  %s1, 4096, %s17, [#allocation3], 128, 128, 8
    $region9: #{category_embedding.1} parent=1 // pred_fallthru
      _
    // Predicated region
    $region10: #{category_embedding.1} parent=1 // pred_check
      _
    $region11: #{category_embedding.1} parent=1 // pred_check_branch
      %24 = sbr.rel (0) target = $region13
    $region12: #{category_embedding.1} parent=1 // pred_region
      %25 = dma.done [#allocation3], 4096
    $region13: #{category_embedding.1} parent=1 // pred_fallthru
      _
    %v26 = vld [vmem:[%s0] sm:$0xff]
    %v27 = vld [vmem:[%s0 + $0x8] sm:$0xff]
    %vm28 = vcmp.lt.s32.totalorder %v26, 256
    %vm29 = vcmp.lt.s32.totalorder %v27, 256
    %v30 = vsel %vm28, %v26, 255
    %v31 = vsel %vm29, %v27, 255
    %vm32 = vcmp.lt.s32.totalorder %v30, 0
    %vm33 = vcmp.lt.s32.totalorder %v31, 0
    %v34 = vsel %vm32, %v30, 0
    %v35 = vsel %vm33, %v31, 0
    %v36 = vlaneseq
    %v37 = vand.u32 %v36, 127
    %v38 = vadd.s32 %v37, 128
    %39 = vset.pattern.permute.xlu0 0
    %40 = vperm.xlu0 %39, %v34
    %v41 = vpop.permute.xlu0 %40
    %42 = vset.pattern.permute.xlu0 0
    %43 = vperm.xlu0 %42, %v35
    %v44 = vpop.permute.xlu0 %43
    %vm45 = vcmp.eq.s32.totalorder %v37, %v41
    %vm46 = vcmp.eq.s32.totalorder %v38, %v41
    %vm47 = vcmp.eq.s32.totalorder %v37, %v44
    %vm48 = vcmp.eq.s32.totalorder %v38, %v44
    %v49 = vsel %vm45, 1, 0
    %v50 = vsel %vm46, 1, 0
    %v51 = vsel %vm47, 1, 0
    %v52 = vsel %vm48, 1, 0
    %v53 = vcvt.s32.f32 %v49
    %v54 = vcvt.s32.f32 %v50
    %v55 = vcvt.s32.f32 %v51
    %v56 = vcvt.s32.f32 %v52
    %v57 = vld [vmem:[#allocation2] sm:$0xff]
    %v58 = vld [vmem:[#allocation2 + $0x8] sm:$0xff]
    %v59 = vld [vmem:[#allocation2 + $0x10] sm:$0xff]
    %v60 = vld [vmem:[#allocation2 + $0x18] sm:$0xff]
    %v61 = vld [vmem:[#allocation2 + $0x20] sm:$0xff]
    %v62 = vld [vmem:[#allocation2 + $0x28] sm:$0xff]
    %v63 = vld [vmem:[#allocation2 + $0x30] sm:$0xff]
    %v64 = vld [vmem:[#allocation2 + $0x38] sm:$0xff]
    %v65 = vld [vmem:[#allocation2 + $0x40] sm:$0xff]
    %v66 = vld [vmem:[#allocation2 + $0x48] sm:$0xff]
    %v67 = vld [vmem:[#allocation2 + $0x50] sm:$0xff]
    %v68 = vld [vmem:[#allocation2 + $0x58] sm:$0xff]
    %v69 = vld [vmem:[#allocation2 + $0x60] sm:$0xff]
    %v70 = vld [vmem:[#allocation2 + $0x68] sm:$0xff]
    %v71 = vld [vmem:[#allocation2 + $0x70] sm:$0xff]
    %v72 = vld [vmem:[#allocation2 + $0x78] sm:$0xff]
    %v73 = vld [vmem:[#allocation2 + $0x80] sm:$0xff]
    %v74 = vld [vmem:[#allocation2 + $0x88] sm:$0xff]
    %v75 = vld [vmem:[#allocation2 + $0x90] sm:$0xff]
    %v76 = vld [vmem:[#allocation2 + $0x98] sm:$0xff]
    %v77 = vld [vmem:[#allocation2 + $0xa0] sm:$0xff]
    %v78 = vld [vmem:[#allocation2 + $0xa8] sm:$0xff]
    %v79 = vld [vmem:[#allocation2 + $0xb0] sm:$0xff]
    %v80 = vld [vmem:[#allocation2 + $0xb8] sm:$0xff]
    %v81 = vld [vmem:[#allocation2 + $0xc0] sm:$0xff]
    %v82 = vld [vmem:[#allocation2 + $0xc8] sm:$0xff]
    %v83 = vld [vmem:[#allocation2 + $0xd0] sm:$0xff]
    %v84 = vld [vmem:[#allocation2 + $0xd8] sm:$0xff]
    %v85 = vld [vmem:[#allocation2 + $0xe0] sm:$0xff]
    %v86 = vld [vmem:[#allocation2 + $0xe8] sm:$0xff]
    %v87 = vld [vmem:[#allocation2 + $0xf0] sm:$0xff]
    %v88 = vld [vmem:[#allocation2 + $0xf8] sm:$0xff]
    %89 = vmatprep.subr.mxu0 0.0
    %90 = vmatpush1.msra.mxu0 %v57
    %91 = vmatprep.subr.mxu0 0.0
    %92 = vmatpush1.msra.mxu0 %v58
    %93 = vmatprep.subr.mxu0 0.0
    %94 = vmatpush1.msra.mxu0 %v59
    %95 = vmatprep.subr.mxu0 0.0
    %96 = vmatpush1.msra.mxu0 %v60
    %97 = vmatprep.subr.mxu0 0.0
    %98 = vmatpush1.msra.mxu0 %v61
    %99 = vmatprep.subr.mxu0 0.0
    %100 = vmatpush1.msra.mxu0 %v62
    %101 = vmatprep.subr.mxu0 0.0
    %102 = vmatpush1.msra.mxu0 %v63
    %103 = vmatprep.subr.mxu0 0.0
    %104 = vmatpush1.msra.mxu0 %v64
    %105 = vmatprep.subr.mxu0 0.0
    %106 = vmatpush1.msra.mxu0 %v65
    %107 = vmatprep.subr.mxu0 0.0
    %108 = vmatpush1.msra.mxu0 %v66
    %109 = vmatprep.subr.mxu0 0.0
    %110 = vmatpush1.msra.mxu0 %v67
    %111 = vmatprep.subr.mxu0 0.0
    %112 = vmatpush1.msra.mxu0 %v68
    %113 = vmatprep.subr.mxu0 0.0
    %114 = vmatpush1.msra.mxu0 %v69
    %115 = vmatprep.subr.mxu0 0.0
    %116 = vmatpush1.msra.mxu0 %v70
    %117 = vmatprep.subr.mxu0 0.0
    %118 = vmatpush1.msra.mxu0 %v71
    %119 = vmatprep.subr.mxu0 0.0
    %120 = vmatpush1.msra.mxu0 %v72
    %121 = vmatprep.subr.mxu0 0.0
    %122 = vmatpush1.msra.mxu0 %v73
    %123 = vmatprep.subr.mxu0 0.0
    %124 = vmatpush1.msra.mxu0 %v74
    %125 = vmatprep.subr.mxu0 0.0
    %126 = vmatpush1.msra.mxu0 %v75
    %127 = vmatprep.subr.mxu0 0.0
    %128 = vmatpush1.msra.mxu0 %v76
    %129 = vmatprep.subr.mxu0 0.0
    %130 = vmatpush1.msra.mxu0 %v77
    %131 = vmatprep.subr.mxu0 0.0
    %132 = vmatpush1.msra.mxu0 %v78
    %133 = vmatprep.subr.mxu0 0.0
    %134 = vmatpush1.msra.mxu0 %v79
    %135 = vmatprep.subr.mxu0 0.0
    %136 = vmatpush1.msra.mxu0 %v80
    %137 = vmatprep.subr.mxu0 0.0
    %138 = vmatpush1.msra.mxu0 %v81
    %139 = vmatprep.subr.mxu0 0.0
    %140 = vmatpush1.msra.mxu0 %v82
    %141 = vmatprep.subr.mxu0 0.0
    %142 = vmatpush1.msra.mxu0 %v83
    %143 = vmatprep.subr.mxu0 0.0
    %144 = vmatpush1.msra.mxu0 %v84
    %145 = vmatprep.subr.mxu0 0.0
    %146 = vmatpush1.msra.mxu0 %v85
    %147 = vmatprep.subr.mxu0 0.0
    %148 = vmatpush1.msra.mxu0 %v86
    %149 = vmatprep.subr.mxu0 0.0
    %150 = vmatpush1.msra.mxu0 %v87
    %151 = vmatprep.subr.mxu0 0.0
    %152 = vmatpush1.msra.mxu0 %v88
    %153 = vmatprep.mubr.f32.mxu0 %v54
    %154 = vmatmul.mubr.f32.gmra.mrb[0].mxu0 %v53
    %v155 = vpop.f32.mrb[0].mxu0
    %v156 = vadd.f32 0.0, %v155
    %v157 = vpop.f32.mrb[0].mxu0
    %158 = vmatprep.mubr.f32.mxu0 %v56
    %159 = vmatmul.mubr.f32.gmra.mrb[0].mxu0 %v55
    %v160 = vpop.f32.mrb[0].mxu0
    %v161 = vadd.f32 0.0, %v160
    %v162 = vpop.f32.mrb[0].mxu0
    %163 = vdwg.mxu0
    %164 = vst [vmem:[#allocation5] sm:$0xff] %v156
    %165 = vst [vmem:[#allocation5 + $0x8] sm:$0xff] %v161
    // Predicated region
    $region14: #{category_embedding.1} parent=1 // pred_check
      _
    $region15: #{category_embedding.1} parent=1 // pred_check_branch
      %167 = sbr.rel (0) target = $region17
    $region16: #{category_embedding.1} parent=1 // pred_region
      %s169 = ssub.s32 256, 256
      %170 = vsyncadd [#allocation4], %s169
      %s171 = sshll.u32 [#allocation5], 4
      %s172 = int_to_ptr.vmem [resolvable:$true] %s171
      %177 = dma.vmem_to_hbm [thread:$0]  %s172, 256, %s2, [#allocation4], 128, 128, 8
    $region17: #{category_embedding.1} parent=1 // pred_fallthru
      _
    // Predicated region
    $region18: #{category_embedding.1} parent=1 // pred_check
      _
    $region19: #{category_embedding.1} parent=1 // pred_check_branch
      %179 = sbr.rel (0) target = $region21
    $region20: #{category_embedding.1} parent=1 // pred_region
      %180 = dma.done [#allocation4], 256
    $region21: #{category_embedding.1} parent=1 // pred_fallthru
      _
    %181 = vsyncpa [#allocation3], 1
    %182 = vsyncpa [#allocation4], 1

</llo_original>
